<compile_context>
chip_gen: v7x
topology: tpu7x:2x2x1
jax: 0.10.0
libtpu: 0.0.40
codegen_flags: <defaults>
</compile_context>

<pallas_src>
import math
import jax
import jax.numpy as jnp
from jax.experimental import pallas as pl
from jax.experimental.pallas import tpu as pltpu

# ----- Actor hyperparameters (small, consistent with the module) -----
OBS_DIM = 32          # obs_shape = (32,)  -> IdentityEncoder.feature_dim = 32
ACTION_DIM = 4        # action_shape = (4,) -> trunk output = 2 * 4 = 8
HIDDEN_DIM = 32
LOG_STD_MIN = -10.0
LOG_STD_MAX = 2.0
BATCH = 2

LANE = 128            # TPU lane width; parameter slabs are lane-tile aligned
OUT_W = 4 * ACTION_DIM          # 16-lane merged output slab
MAX_TILE_ROWS = 2048            # max batch rows per grid step


def actor_kernel(obs_ref, noise_ref, w_ref, b_ref, out_ref):
    A = ACTION_DIM
    cdt = w_ref.dtype            # matmul operand dtype (bf16 default, f32 for checks)

    x = obs_ref[...].astype(cdt)     # (tb, OBS_DIM)
    noise = noise_ref[...]           # (tb, A), f32

    # Lane-aligned resident parameter slabs:
    #   w_ref : (3, 128, 128), layer l's (in, out) weight at [l, :in, :out], rest zero.
    #   b_ref : (3, 1, 128) f32, layer l's bias at [l, 0, :out], rest zero.
    w1 = w_ref[0][:OBS_DIM, :]       # (OBS_DIM, 128)
    w2 = w_ref[1]                    # (128, 128)  (rows >= HIDDEN_DIM are zero)
    w3 = w_ref[2]                    # (128, 128)
    b1 = b_ref[0]                    # (1, 128)
    b2 = b_ref[1]
    b3 = b_ref[2]

    # trunk: Linear -> ReLU -> Linear -> ReLU -> Linear
    # (bf16 MXU operands, f32 accumulation, f32 elementwise tail).
    h1 = jnp.maximum(jnp.dot(x, w1, preferred_element_type=jnp.float32) + b1, 0.0)
    h2 = jnp.maximum(
        jnp.dot(h1.astype(cdt), w2, preferred_element_type=jnp.float32) + b2, 0.0)
    out = jnp.dot(h2.astype(cdt), w3, preferred_element_type=jnp.float32) + b3  # (tb,128)

    mu = out[:, :A]                                   # chunk(2, dim=-1)
    log_std = jnp.tanh(out[:, A:2 * A])
    log_std = LOG_STD_MIN + 0.5 * (LOG_STD_MAX - LOG_STD_MIN) * (log_std + 1.0)

    # reparameterized sample
    std = jnp.exp(log_std)
    pi = mu + noise * std

    # gaussian_logprob(noise, log_std)
    log_pi = (jnp.sum(-0.5 * noise * noise - log_std, axis=-1, keepdims=True)
              - 0.5 * math.log(2.0 * math.pi) * A)

    # squash(mu, pi, log_pi)
    mu_t = jnp.tanh(mu)
    pi_t = jnp.tanh(pi)
    log_pi = log_pi - jnp.sum(
        jnp.log(jnp.maximum(1.0 - pi_t * pi_t, 0.0) + 1e-6), axis=-1, keepdims=True)

    # Narrow 16-lane output slab: [mu(4) | pi(4) | log_std(4) | log_pi(1) | 0-pad(3)].
    tb = mu_t.shape[0]
    out_ref[...] = jnp.concatenate(
        [mu_t, pi_t, log_std, log_pi,
         jnp.zeros((tb, OUT_W - (3 * A + 1)), jnp.float32)], axis=-1)


def _round_up(x, m):
    return (x + m - 1) // m * m


def pack_params(params, compute_dtype=jnp.bfloat16):
    """Pack (w1,b1,w2,b2,w3,b3) -> lane-aligned (3,128,128) / (3,1,128) slabs.

    Weights are (in, out); each is zero-padded to (128, 128) so every layer's
    columns start at lane offset 0 of its own lane tile (no in-kernel relayout),
    and hidden activations stay 128 lanes wide through the chain.
    """
    w1, b1, w2, b2, w3, b3 = params

    def pad_w(w):
        return jnp.pad(w, ((0, LANE - w.shape[0]), (0, LANE - w.shape[1])))

    def pad_b(b):
        return jnp.pad(b, ((0, 0), (0, LANE - b.shape[1])))

    w_packed = jnp.stack([pad_w(w1), pad_w(w2), pad_w(w3)]).astype(compute_dtype)
    b_packed = jnp.stack([pad_b(b1), pad_b(b2), pad_b(b3)]).astype(jnp.float32)
    return w_packed, b_packed


@jax.jit
def actor_forward(obs, noise, w_packed, b_packed):
    """Fused Actor forward pass. Returns (mu, pi, log_pi, log_std)."""
    B = obs.shape[0]
    A = ACTION_DIM

    # Batch tile: as large as possible (<= MAX_TILE_ROWS), multiple of 8 sublanes,
    # chosen to minimize padding waste (e.g. B=1030 -> 2 tiles of 520, not 2x1024).
    n_tiles = max(1, -(-B // MAX_TILE_ROWS))
    tb = _round_up(-(-B // n_tiles), 8)
    b_pad = n_tiles * tb
    obs_p = jnp.pad(obs, ((0, b_pad - B), (0, 0)))
    noise_p = jnp.pad(noise, ((0, b_pad - B), (0, 0)))

    out = pl.pallas_call(
        actor_kernel,
        out_shape=jax.ShapeDtypeStruct((b_pad, OUT_W), jnp.float32),
        grid_spec=pltpu.PrefetchScalarGridSpec(
            num_scalar_prefetch=0,
            grid=(n_tiles,),
            in_specs=[
                pl.BlockSpec((tb, OBS_DIM), lambda i: (i, 0)),          # per-tile
                pl.BlockSpec((tb, A), lambda i: (i, 0)),                # per-tile
                pl.BlockSpec(w_packed.shape, lambda i: (0, 0, 0)),      # resident
                pl.BlockSpec(b_packed.shape, lambda i: (0, 0, 0)),      # resident
            ],
            out_specs=pl.BlockSpec((tb, OUT_W), lambda i: (i, 0)),
        ),
        compiler_params=pltpu.CompilerParams(
            dimension_semantics=("parallel",)),
    )(obs_p, noise_p, w_packed, b_packed)

    out = out[:B]
    mu = out[:, 0:A]
    pi = out[:, A:2 * A]
    log_std = out[:, 2 * A:3 * A]
    log_pi = out[:, 3 * A:3 * A + 1]
    return mu, pi, log_pi, log_std


def orthogonal(key, out_dim, in_dim):
    """Deterministic orthogonal init matching nn.init.orthogonal_ shapes (out,in)."""
    n, m = max(out_dim, in_dim), min(out_dim, in_dim)
    a = jax.random.normal(key, (n, m), dtype=jnp.float32)
    q, r = jnp.linalg.qr(a)
    q = q * jnp.sign(jnp.diagonal(r))
    if out_dim < in_dim:
        q = q.T
    return q  # (out_dim, in_dim)


def reference_forward(obs, noise, params, compute_dtype=jnp.float32):
    """Pure-JAX reference of Actor.forward (compute_pi=True, compute_log_pi=True).

    compute_dtype mirrors the kernel's matmul-operand dtype (f32 accumulation).
    """
    w1, b1, w2, b2, w3, b3 = params

    def mm(a, w):
        return jnp.dot(a.astype(compute_dtype), w.astype(compute_dtype),
                       preferred_element_type=jnp.float32)

    h = jnp.maximum(mm(obs, w1) + b1, 0.0)
    h = jnp.maximum(mm(h, w2) + b2, 0.0)
    out = mm(h, w3) + b3
    A = ACTION_DIM
    mu, log_std = out[:, :A], out[:, A:]
    log_std = jnp.tanh(log_std)
    log_std = LOG_STD_MIN + 0.5 * (LOG_STD_MAX - LOG_STD_MIN) * (log_std + 1.0)
    std = jnp.exp(log_std)
    pi = mu + noise * std
    log_pi = (jnp.sum(-0.5 * noise ** 2 - log_std, axis=-1, keepdims=True)
              - 0.5 * math.log(2.0 * math.pi) * A)
    mu_t, pi_t = jnp.tanh(mu), jnp.tanh(pi)
    log_pi = log_pi - jnp.sum(
        jnp.log(jnp.maximum(1.0 - pi_t ** 2, 0.0) + 1e-6), axis=-1, keepdims=True)
    return mu_t, pi_t, log_pi, log_std


if __name__ == "__main__":
    key = jax.random.PRNGKey(0)
    k_obs, k_noise, k1, k2, k3 = jax.random.split(key, 5)

    obs = jax.random.normal(k_obs, (BATCH, OBS_DIM), dtype=jnp.float32)
    noise = jax.random.normal(k_noise, (BATCH, ACTION_DIM), dtype=jnp.float32)

    # weight_init: orthogonal weights, zero biases. Kernel takes W as (in, out).
    w1 = orthogonal(k1, HIDDEN_DIM, OBS_DIM).T
    b1 = jnp.zeros((1, HIDDEN_DIM), jnp.float32)
    w2 = orthogonal(k2, HIDDEN_DIM, HIDDEN_DIM).T
    b2 = jnp.zeros((1, HIDDEN_DIM), jnp.float32)
    w3 = orthogonal(k3, 2 * ACTION_DIM, HIDDEN_DIM).T
    b3 = jnp.zeros((1, 2 * ACTION_DIM), jnp.float32)
    params = (w1, b1, w2, b2, w3, b3)

    # 1) f32 matmul operands: tight semantic check against the f32 reference.
    wp32, bp32 = pack_params(params, compute_dtype=jnp.float32)
    got32 = actor_forward(obs, noise, wp32, bp32)
    jax.block_until_ready(got32)
    ref32 = reference_forward(obs, noise, params, compute_dtype=jnp.float32)
    for got, want in zip(got32, ref32):
        assert got.shape == want.shape, (got.shape, want.shape)
        assert jnp.allclose(got, want, atol=1e-5, rtol=1e-5), (got, want)

    # 2) bf16 matmul operands (performance default): check against a reference
    #    that mirrors the bf16-operand / f32-accumulate math.
    wp16, bp16 = pack_params(params, compute_dtype=jnp.bfloat16)
    got16 = actor_forward(obs, noise, wp16, bp16)
    jax.block_until_ready(got16)
    ref16 = reference_forward(obs, noise, params, compute_dtype=jnp.bfloat16)
    for got, want in zip(got16, ref16):
        assert got.shape == want.shape, (got.shape, want.shape)
        assert jnp.allclose(got, want, atol=2e-2, rtol=2e-2), (got, want)

    print("KERNEL_OK")
</pallas_src>

<mosaic_0001>
module attributes {stable_mosaic.version = 11 : i64} {
  func.func @actor_kernel(%arg0: i32, %arg1: memref<8x32xf32, #tpu.memory_space<vmem>>, %arg2: memref<8x4xf32, #tpu.memory_space<vmem>>, %arg3: memref<3x128x128xf32, #tpu.memory_space<vmem>>, %arg4: memref<3x1x128xf32, #tpu.memory_space<vmem>>, %arg5: memref<8x16xf32, #tpu.memory_space<vmem>>) attributes {dimension_semantics = [#tpu.dimension_semantics<parallel>], iteration_bounds = array<i64: 1>, scalar_prefetch = 0 : i64, scratch_operands = 0 : i64, tpu.core_type = #tpu.core_type<tc>, window_params = [{transform_indices = @transform_0, window_bounds = array<i64: 8, 32>}, {transform_indices = @transform_1, window_bounds = array<i64: 8, 4>}, {pipeline_mode = #tpu.pipeline_mode<synchronous>, transform_indices = @transform_2, window_bounds = array<i64: 3, 128, 128>}, {pipeline_mode = #tpu.pipeline_mode<synchronous>, transform_indices = @transform_3, window_bounds = array<i64: 3, 1, 128>}, {transform_indices = @transform_4, window_bounds = array<i64: 8, 16>}]} {
    %c0 = arith.constant 0 : index
    %c0_0 = arith.constant 0 : index
    %0 = vector.load %arg1[%c0, %c0_0] : memref<8x32xf32, #tpu.memory_space<vmem>>, vector<8x32xf32>
    %c0_1 = arith.constant 0 : index
    %c0_2 = arith.constant 0 : index
    %1 = vector.load %arg2[%c0_1, %c0_2] : memref<8x4xf32, #tpu.memory_space<vmem>>, vector<8x4xf32>
    %c0_3 = arith.constant 0 : index
    %c0_4 = arith.constant 0 : index
    %c0_5 = arith.constant 0 : index
    %2 = vector.load %arg3[%c0_3, %c0_4, %c0_5] : memref<3x128x128xf32, #tpu.memory_space<vmem>>, vector<1x128x128xf32>
    %3 = vector.shape_cast %2 : vector<1x128x128xf32> to vector<128x128xf32>
    %4 = vector.extract_strided_slice %3 {offsets = [0, 0], sizes = [32, 128], strides = [1, 1]} : vector<128x128xf32> to vector<32x128xf32>
    %c1 = arith.constant 1 : index
    %c0_6 = arith.constant 0 : index
    %c0_7 = arith.constant 0 : index
    %5 = vector.load %arg3[%c1, %c0_6, %c0_7] : memref<3x128x128xf32, #tpu.memory_space<vmem>>, vector<1x128x128xf32>
    %6 = vector.shape_cast %5 : vector<1x128x128xf32> to vector<128x128xf32>
    %c2 = arith.constant 2 : index
    %c0_8 = arith.constant 0 : index
    %c0_9 = arith.constant 0 : index
    %7 = vector.load %arg3[%c2, %c0_8, %c0_9] : memref<3x128x128xf32, #tpu.memory_space<vmem>>, vector<1x128x128xf32>
    %8 = vector.shape_cast %7 : vector<1x128x128xf32> to vector<128x128xf32>
    %c0_10 = arith.constant 0 : index
    %c0_11 = arith.constant 0 : index
    %c0_12 = arith.constant 0 : index
    %9 = vector.load %arg4[%c0_10, %c0_11, %c0_12] : memref<3x1x128xf32, #tpu.memory_space<vmem>>, vector<1x1x128xf32>
    %10 = vector.shape_cast %9 : vector<1x1x128xf32> to vector<1x128xf32>
    %c1_13 = arith.constant 1 : index
    %c0_14 = arith.constant 0 : index
    %c0_15 = arith.constant 0 : index
    %11 = vector.load %arg4[%c1_13, %c0_14, %c0_15] : memref<3x1x128xf32, #tpu.memory_space<vmem>>, vector<1x1x128xf32>
    %12 = vector.shape_cast %11 : vector<1x1x128xf32> to vector<1x128xf32>
    %c2_16 = arith.constant 2 : index
    %c0_17 = arith.constant 0 : index
    %c0_18 = arith.constant 0 : index
    %13 = vector.load %arg4[%c2_16, %c0_17, %c0_18] : memref<3x1x128xf32, #tpu.memory_space<vmem>>, vector<1x1x128xf32>
    %14 = vector.shape_cast %13 : vector<1x1x128xf32> to vector<1x128xf32>
    %cst = arith.constant dense<0.000000e+00> : vector<8x128xf32>
    %15 = tpu.matmul %0, %4, %cst {dimension_numbers = #tpu.dot_dimension_numbers<[1], [0], [0], [1], [0, 0, 1, 1], [], []>} : vector<8x32xf32>, vector<32x128xf32>, vector<8x128xf32> -> vector<8x128xf32>
    %16 = vector.broadcast %10 : vector<1x128xf32> to vector<8x128xf32>
    %17 = arith.addf %15, %16 : vector<8x128xf32>
    %cst_19 = arith.constant 0.000000e+00 : f32
    %18 = vector.broadcast %cst_19 : f32 to vector<8x128xf32>
    %19 = arith.maximumf %17, %18 : vector<8x128xf32>
    %cst_20 = arith.constant dense<0.000000e+00> : vector<8x128xf32>
    %20 = tpu.matmul %19, %6, %cst_20 {dimension_numbers = #tpu.dot_dimension_numbers<[1], [0], [0], [1], [0, 0, 1, 1], [], []>} : vector<8x128xf32>, vector<128x128xf32>, vector<8x128xf32> -> vector<8x128xf32>
    %21 = vector.broadcast %12 : vector<1x128xf32> to vector<8x128xf32>
    %22 = arith.addf %20, %21 : vector<8x128xf32>
    %cst_21 = arith.constant 0.000000e+00 : f32
    %23 = vector.broadcast %cst_21 : f32 to vector<8x128xf32>
    %24 = arith.maximumf %22, %23 : vector<8x128xf32>
    %cst_22 = arith.constant dense<0.000000e+00> : vector<8x128xf32>
    %25 = tpu.matmul %24, %8, %cst_22 {dimension_numbers = #tpu.dot_dimension_numbers<[1], [0], [0], [1], [0, 0, 1, 1], [], []>} : vector<8x128xf32>, vector<128x128xf32>, vector<8x128xf32> -> vector<8x128xf32>
    %26 = vector.broadcast %14 : vector<1x128xf32> to vector<8x128xf32>
    %27 = arith.addf %25, %26 : vector<8x128xf32>
    %28 = vector.extract_strided_slice %27 {offsets = [0, 0], sizes = [8, 4], strides = [1, 1]} : vector<8x128xf32> to vector<8x4xf32>
    %29 = vector.extract_strided_slice %27 {offsets = [0, 4], sizes = [8, 4], strides = [1, 1]} : vector<8x128xf32> to vector<8x4xf32>
    %30 = math.tanh %29 : vector<8x4xf32>
    %cst_23 = arith.constant 1.000000e+00 : f32
    %31 = vector.broadcast %cst_23 : f32 to vector<8x4xf32>
    %32 = arith.addf %30, %31 : vector<8x4xf32>
    %cst_24 = arith.constant 6.000000e+00 : f32
    %33 = vector.broadcast %cst_24 : f32 to vector<8x4xf32>
    %34 = arith.mulf %33, %32 : vector<8x4xf32>
    %cst_25 = arith.constant -1.000000e+01 : f32
    %35 = vector.broadcast %cst_25 : f32 to vector<8x4xf32>
    %36 = arith.addf %35, %34 : vector<8x4xf32>
    %37 = math.exp %36 : vector<8x4xf32>
    %38 = arith.mulf %1, %37 : vector<8x4xf32>
    %39 = arith.addf %28, %38 : vector<8x4xf32>
    %cst_26 = arith.constant -5.000000e-01 : f32
    %40 = vector.broadcast %cst_26 : f32 to vector<8x4xf32>
    %41 = arith.mulf %40, %1 : vector<8x4xf32>
    %42 = arith.mulf %41, %1 : vector<8x4xf32>
    %43 = arith.subf %42, %36 : vector<8x4xf32>
    %cst_27 = arith.constant dense<0.000000e+00> : vector<8xf32>
    %44 = vector.multi_reduction <add>, %43, %cst_27 [1] : vector<8x4xf32> to vector<8xf32>
    %45 = vector.shape_cast %44 : vector<8xf32> to vector<8x1xf32>
    %cst_28 = arith.constant 3.67575407 : f32
    %46 = vector.broadcast %cst_28 : f32 to vector<8x1xf32>
    %47 = arith.subf %45, %46 : vector<8x1xf32>
    %48 = math.tanh %28 : vector<8x4xf32>
    %49 = math.tanh %39 : vector<8x4xf32>
    %50 = arith.mulf %49, %49 : vector<8x4xf32>
    %cst_29 = arith.constant 1.000000e+00 : f32
    %51 = vector.broadcast %cst_29 : f32 to vector<8x4xf32>
    %52 = arith.subf %51, %50 : vector<8x4xf32>
    %cst_30 = arith.constant 0.000000e+00 : f32
    %53 = vector.broadcast %cst_30 : f32 to vector<8x4xf32>
    %54 = arith.maximumf %52, %53 : vector<8x4xf32>
    %cst_31 = arith.constant 9.99999997E-7 : f32
    %55 = vector.broadcast %cst_31 : f32 to vector<8x4xf32>
    %56 = arith.addf %54, %55 : vector<8x4xf32>
    %57 = math.log %56 : vector<8x4xf32>
    %cst_32 = arith.constant dense<0.000000e+00> : vector<8xf32>
    %58 = vector.multi_reduction <add>, %57, %cst_32 [1] : vector<8x4xf32> to vector<8xf32>
    %59 = vector.shape_cast %58 : vector<8xf32> to vector<8x1xf32>
    %60 = arith.subf %47, %59 : vector<8x1xf32>
    %cst_33 = arith.constant 0.000000e+00 : f32
    %61 = vector.broadcast %cst_33 : f32 to vector<8x3xf32>
    %62 = tpu.concatenate %48, %49, %36, %60, %61 in 1 : vector<8x4xf32>, vector<8x4xf32>, vector<8x4xf32>, vector<8x1xf32>, vector<8x3xf32> -> vector<8x16xf32>
    %c0_34 = arith.constant 0 : index
    %c0_35 = arith.constant 0 : index
    %63 = vector.load %arg5[%c0_34, %c0_35] : memref<8x16xf32, #tpu.memory_space<vmem>>, vector<8x16xf32>
    tpu.vector_store %arg5[%c0_34, %c0_35], %62 {strides = array<i32>} : memref<8x16xf32, #tpu.memory_space<vmem>>, vector<8x16xf32>,
    return
  }
  func.func @transform_0(%arg0: i32) -> (i32, i32) {
    %c0_i32 = arith.constant 0 : i32
    %c0_i32_0 = arith.constant 0 : i32
    return %arg0, %c0_i32 : i32, i32
  }
  func.func @transform_1(%arg0: i32) -> (i32, i32) {
    %c0_i32 = arith.constant 0 : i32
    %c0_i32_0 = arith.constant 0 : i32
    return %arg0, %c0_i32 : i32, i32
  }
  func.func @transform_2(%arg0: i32) -> (i32, i32, i32) {
    %c0_i32 = arith.constant 0 : i32
    %c0_i32_0 = arith.constant 0 : i32
    %c0_i32_1 = arith.constant 0 : i32
    %c0_i32_2 = arith.constant 0 : i32
    return %c0_i32, %c0_i32_0, %c0_i32_1 : i32, i32, i32
  }
  func.func @transform_3(%arg0: i32) -> (i32, i32, i32) {
    %c0_i32 = arith.constant 0 : i32
    %c0_i32_0 = arith.constant 0 : i32
    %c0_i32_1 = arith.constant 0 : i32
    %c0_i32_2 = arith.constant 0 : i32
    return %c0_i32, %c0_i32_0, %c0_i32_1 : i32, i32, i32
  }
  func.func @transform_4(%arg0: i32) -> (i32, i32) {
    %c0_i32 = arith.constant 0 : i32
    %c0_i32_0 = arith.constant 0 : i32
    return %arg0, %c0_i32 : i32, i32
  }
}

</mosaic_0001>

<llo_original>
// kernel: actor_forward.1
$region0: #{actor_forward.1}
  #allocation0 [shape = 'u32[]', space=smem, size = 0x4, offset = 0x4, fixed_abs, tag = 'smem constant byte address 0x4 - core index']
  #allocation1 [shape = 'u32[144,128]{1,0:T(1,128)}', space=vmem, size = 0x12000, scoped, tag = 'internal scratch']
  %s0 = inlined_call_operand.vmem [shape: f32[8,32], index: 0, kind: input, shape index: {}]
  %s1 = inlined_call_operand.vmem [shape: f32[8,4], index: 1, kind: input, shape index: {}]
  %s2 = inlined_call_operand.hbm [shape: f32[3,128,128], index: 2, kind: input, shape index: {}]
  %s3 = inlined_call_operand.vmem [shape: f32[3,1,128], index: 3, kind: input, shape index: {}]
  %s4 = inlined_call_operand.vmem [shape: f32[8,16], index: 4, kind: output, shape index: {}]
  %s5 = sld [smem:[#allocation0]]
  $region30: #{actor_forward.1} parent=0
    _
  %s7 = ssub.s32 1, %s5
  %s8 = scalar_select 0, %s7, %s5
  $region1: #{actor_forward.1} parent=0
    #allocation2 [shape = 'u8[196608]{0}', space=vmem, size = 0x30000, scoped, tag = 'input window, operand 2, single buffered']
    #allocation3 [shape = 's32[1]{0}', space=sflag, size = 0x4, scoped, tag = 'scoped memory for actor_forward.1']
    %9 = vsyncpa [#allocation3], 0
    // Predicated region
    $region2: #{actor_forward.1} parent=1 // pred_check
      _
    $region3: #{actor_forward.1} parent=1 // pred_check_branch
      %11 = sbr.rel (0) target = $region5
    $region4: #{actor_forward.1} parent=1 // pred_region
      _
    $region5: #{actor_forward.1} parent=1 // pred_fallthru
      _
    // Predicated region
    $region6: #{actor_forward.1} parent=1 // pred_check
      _
    $region7: #{actor_forward.1} parent=1 // pred_check_branch
      %13 = sbr.rel (0) target = $region9
    $region8: #{actor_forward.1} parent=1 // pred_region
      _
    $region9: #{actor_forward.1} parent=1 // pred_fallthru
      _
    // Predicated region
    $region10: #{actor_forward.1} parent=1 // pred_check
      _
    $region11: #{actor_forward.1} parent=1 // pred_check_branch
      %15 = sbr.rel (0) target = $region13
    $region12: #{actor_forward.1} parent=1 // pred_region
      %s17 = ssub.s32 6144, 6144
      %18 = vsyncadd [#allocation3], %s17
      %s19 = sshll.u32 [#allocation2], 4
      %s20 = int_to_ptr.vmem [resolvable:$true] %s19
      %25 = dma.hbm_to_vmem [thread:$0]  %s2, 6144, %s20, [#allocation3], 128, 128, 8
    $region13: #{actor_forward.1} parent=1 // pred_fallthru
      _
    // Predicated region
    $region14: #{actor_forward.1} parent=1 // pred_check
      _
    $region15: #{actor_forward.1} parent=1 // pred_check_branch
      %27 = sbr.rel (0) target = $region17
    $region16: #{actor_forward.1} parent=1 // pred_region
      _
    $region17: #{actor_forward.1} parent=1 // pred_fallthru
      _
    // Predicated region
    $region18: #{actor_forward.1} parent=1 // pred_check
      _
    $region19: #{actor_forward.1} parent=1 // pred_check_branch
      %29 = sbr.rel (0) target = $region21
    $region20: #{actor_forward.1} parent=1 // pred_region
      %30 = dma.done [#allocation3], 6144
    $region21: #{actor_forward.1} parent=1 // pred_fallthru
      _
    %v31 = vld [vmem:[%s0] sm:$0xff]
    %v32 = vld [vmem:[%s1] sm:$0xff]
    %v33 = vld [vmem:[#allocation2] sm:$0xff]
    %v34 = vld [vmem:[#allocation2 + $0x8] sm:$0xff]
    %v35 = vld [vmem:[#allocation2 + $0x10] sm:$0xff]
    %v36 = vld [vmem:[#allocation2 + $0x18] sm:$0xff]
    %s37 = scalar_lea.vmem [#allocation2], 128
    %v38 = vld [vmem:[%s37] sm:$0xff]
    %v39 = vld [vmem:[%s37 + $0x8] sm:$0xff]
    %v40 = vld [vmem:[%s37 + $0x10] sm:$0xff]
    %v41 = vld [vmem:[%s37 + $0x18] sm:$0xff]
    %v42 = vld [vmem:[%s37 + $0x20] sm:$0xff]
    %v43 = vld [vmem:[%s37 + $0x28] sm:$0xff]
    %v44 = vld [vmem:[%s37 + $0x30] sm:$0xff]
    %v45 = vld [vmem:[%s37 + $0x38] sm:$0xff]
    %v46 = vld [vmem:[%s37 + $0x40] sm:$0xff]
    %v47 = vld [vmem:[%s37 + $0x48] sm:$0xff]
    %v48 = vld [vmem:[%s37 + $0x50] sm:$0xff]
    %v49 = vld [vmem:[%s37 + $0x58] sm:$0xff]
    %v50 = vld [vmem:[%s37 + $0x60] sm:$0xff]
    %v51 = vld [vmem:[%s37 + $0x68] sm:$0xff]
    %v52 = vld [vmem:[%s37 + $0x70] sm:$0xff]
    %v53 = vld [vmem:[%s37 + $0x78] sm:$0xff]
    %s54 = scalar_lea.vmem [#allocation2], 256
    %v55 = vld [vmem:[%s54] sm:$0xff]
    %v56 = vld [vmem:[%s54 + $0x8] sm:$0xff]
    %v57 = vld [vmem:[%s54 + $0x10] sm:$0xff]
    %v58 = vld [vmem:[%s54 + $0x18] sm:$0xff]
    %v59 = vld [vmem:[%s54 + $0x20] sm:$0xff]
    %v60 = vld [vmem:[%s54 + $0x28] sm:$0xff]
    %v61 = vld [vmem:[%s54 + $0x30] sm:$0xff]
    %v62 = vld [vmem:[%s54 + $0x38] sm:$0xff]
    %v63 = vld [vmem:[%s54 + $0x40] sm:$0xff]
    %v64 = vld [vmem:[%s54 + $0x48] sm:$0xff]
    %v65 = vld [vmem:[%s54 + $0x50] sm:$0xff]
    %v66 = vld [vmem:[%s54 + $0x58] sm:$0xff]
    %v67 = vld [vmem:[%s54 + $0x60] sm:$0xff]
    %v68 = vld [vmem:[%s54 + $0x68] sm:$0xff]
    %v69 = vld [vmem:[%s54 + $0x70] sm:$0xff]
    %v70 = vld [vmem:[%s54 + $0x78] sm:$0xff]
    %v71 = vld [vmem:[%s3] sm:$0x1]
    %s72 = scalar_lea.vmem %s3, 1
    %v73 = vld [vmem:[%s72] sm:$0x1]
    %s74 = scalar_lea.vmem %s3, 2
    %v75 = vld [vmem:[%s74] sm:$0x1]
    %v77 = vlaneseq
    %v78 = vshrl.u32 %v77, 7
    %v79 = vsub.s32 0, %v78
    %v80 = vrot.slane %v71, %v79
    %vm82 = vcmask 261120
    %v84 = vsel %vm82, %v31, 0
    %86 = vmatprep.subr.mxu0 0.0
    %87 = vmatpush1.msra.mxu0 %v33
    %88 = vmatprep.subr.mxu0 0.0
    %89 = vmatpush1.msra.mxu0 %v34
    %90 = vmatprep.subr.mxu0 0.0
    %91 = vmatpush1.msra.mxu0 %v35
    %92 = vmatprep.subr.mxu0 0.0
    %93 = vmatpush1.msra.mxu0 %v36
    %94 = vmatprep.subr.mxu0 0.0
    %95 = vmatpush1.msra.mxu0 0.0
    %96 = vmatprep.subr.mxu0 0.0
    %97 = vmatpush1.msra.mxu0 0.0
    %98 = vmatprep.subr.mxu0 0.0
    %99 = vmatpush1.msra.mxu0 0.0
    %100 = vmatprep.subr.mxu0 0.0
    %101 = vmatpush1.msra.mxu0 0.0
    %102 = vmatprep.subr.mxu0 0.0
    %103 = vmatpush1.msra.mxu0 0.0
    %104 = vmatprep.subr.mxu0 0.0
    %105 = vmatpush1.msra.mxu0 0.0
    %106 = vmatprep.subr.mxu0 0.0
    %107 = vmatpush1.msra.mxu0 0.0
    %108 = vmatprep.subr.mxu0 0.0
    %109 = vmatpush1.msra.mxu0 0.0
    %110 = vmatprep.subr.mxu0 0.0
    %111 = vmatpush1.msra.mxu0 0.0
    %112 = vmatprep.subr.mxu0 0.0
    %113 = vmatpush1.msra.mxu0 0.0
    %114 = vmatprep.subr.mxu0 0.0
    %115 = vmatpush1.msra.mxu0 0.0
    %116 = vmatprep.subr.mxu0 0.0
    %117 = vmatpush1.msra.mxu0 0.0
    %118 = vmatprep.subr.mxu0 0.0
    %119 = vmatpush1.msra.mxu0 0.0
    %120 = vmatprep.subr.mxu0 0.0
    %121 = vmatpush1.msra.mxu0 0.0
    %122 = vmatprep.subr.mxu0 0.0
    %123 = vmatpush1.msra.mxu0 0.0
    %124 = vmatprep.subr.mxu0 0.0
    %125 = vmatpush1.msra.mxu0 0.0
    %126 = vmatprep.subr.mxu0 0.0
    %127 = vmatpush1.msra.mxu0 0.0
    %128 = vmatprep.subr.mxu0 0.0
    %129 = vmatpush1.msra.mxu0 0.0
    %130 = vmatprep.subr.mxu0 0.0
    %131 = vmatpush1.msra.mxu0 0.0
    %132 = vmatprep.subr.mxu0 0.0
    %133 = vmatpush1.msra.mxu0 0.0
    %134 = vmatprep.subr.mxu0 0.0
    %135 = vmatpush1.msra.mxu0 0.0
    %136 = vmatprep.subr.mxu0 0.0
    %137 = vmatpush1.msra.mxu0 0.0
    %138 = vmatprep.subr.mxu0 0.0
    %139 = vmatpush1.msra.mxu0 0.0
    %140 = vmatprep.subr.mxu0 0.0
    %141 = vmatpush1.msra.mxu0 0.0
    %142 = vmatprep.subr.mxu0 0.0
    %143 = vmatpush1.msra.mxu0 0.0
    %144 = vmatprep.subr.mxu0 0.0
    %145 = vmatpush1.msra.mxu0 0.0
    %146 = vmatprep.subr.mxu0 0.0
    %147 = vmatpush1.msra.mxu0 0.0
    %148 = vmatprep.subr.mxu0 0.0
    %149 = vmatpush1.msra.mxu0 0.0
    %150 = vmatprep.mubr.f32.mxu0 0.0
    %151 = vmatmul.mubr.f32.gmra.mrb[0].mxu0 %v84
    %v152 = vpop.f32.mrb[0].mxu0
    %v153 = vadd.f32 %v80, %v152
    %v154 = vpop.f32.mrb[0].mxu0
    %155 = vdwg.mxu0
    %v156 = vmax.f32 %v153, 0.0
    %v158 = vlaneseq
    %v159 = vshrl.u32 %v158, 7
    %v160 = vsub.s32 0, %v159
    %v161 = vrot.slane %v73, %v160
    %163 = vmatprep.subr.mxu0 0.0
    %164 = vmatpush1.msra.mxu0 %v38
    %165 = vmatprep.subr.mxu0 0.0
    %166 = vmatpush1.msra.mxu0 %v39
    %167 = vmatprep.subr.mxu0 0.0
    %168 = vmatpush1.msra.mxu0 %v40
    %169 = vmatprep.subr.mxu0 0.0
    %170 = vmatpush1.msra.mxu0 %v41
    %171 = vmatprep.subr.mxu0 0.0
    %172 = vmatpush1.msra.mxu0 %v42
    %173 = vmatprep.subr.mxu0 0.0
    %174 = vmatpush1.msra.mxu0 %v43
    %175 = vmatprep.subr.mxu0 0.0
    %176 = vmatpush1.msra.mxu0 %v44
    %177 = vmatprep.subr.mxu0 0.0
    %178 = vmatpush1.msra.mxu0 %v45
    %179 = vmatprep.subr.mxu0 0.0
    %180 = vmatpush1.msra.mxu0 %v46
    %181 = vmatprep.subr.mxu0 0.0
    %182 = vmatpush1.msra.mxu0 %v47
    %183 = vmatprep.subr.mxu0 0.0
    %184 = vmatpush1.msra.mxu0 %v48
    %185 = vmatprep.subr.mxu0 0.0
    %186 = vmatpush1.msra.mxu0 %v49
    %187 = vmatprep.subr.mxu0 0.0
    %188 = vmatpush1.msra.mxu0 %v50
    %189 = vmatprep.subr.mxu0 0.0
    %190 = vmatpush1.msra.mxu0 %v51
    %191 = vmatprep.subr.mxu0 0.0
    %192 = vmatpush1.msra.mxu0 %v52
    %193 = vmatprep.subr.mxu0 0.0
    %194 = vmatpush1.msra.mxu0 %v53
    %195 = vmatprep.subr.mxu0 0.0
    %196 = vmatpush1.msra.mxu0 0.0
    %197 = vmatprep.subr.mxu0 0.0
    %198 = vmatpush1.msra.mxu0 0.0
    %199 = vmatprep.subr.mxu0 0.0
    %200 = vmatpush1.msra.mxu0 0.0
    %201 = vmatprep.subr.mxu0 0.0
    %202 = vmatpush1.msra.mxu0 0.0
    %203 = vmatprep.subr.mxu0 0.0
    %204 = vmatpush1.msra.mxu0 0.0
    %205 = vmatprep.subr.mxu0 0.0
    %206 = vmatpush1.msra.mxu0 0.0
    %207 = vmatprep.subr.mxu0 0.0
    %208 = vmatpush1.msra.mxu0 0.0
    %209 = vmatprep.subr.mxu0 0.0
    %210 = vmatpush1.msra.mxu0 0.0
    %211 = vmatprep.subr.mxu0 0.0
    %212 = vmatpush1.msra.mxu0 0.0
    %213 = vmatprep.subr.mxu0 0.0
    %214 = vmatpush1.msra.mxu0 0.0
    %215 = vmatprep.subr.mxu0 0.0
    %216 = vmatpush1.msra.mxu0 0.0
    %217 = vmatprep.subr.mxu0 0.0
    %218 = vmatpush1.msra.mxu0 0.0
    %219 = vmatprep.subr.mxu0 0.0
    %220 = vmatpush1.msra.mxu0 0.0
    %221 = vmatprep.subr.mxu0 0.0
    %222 = vmatpush1.msra.mxu0 0.0
    %223 = vmatprep.subr.mxu0 0.0
    %224 = vmatpush1.msra.mxu0 0.0
    %225 = vmatprep.subr.mxu0 0.0
    %226 = vmatpush1.msra.mxu0 0.0
    %227 = vmatprep.mubr.f32.mxu0 0.0
    %228 = vmatmul.mubr.f32.gmra.mrb[0].mxu0 %v156
    %v229 = vpop.f32.mrb[0].mxu0
    %v230 = vadd.f32 %v161, %v229
    %v231 = vpop.f32.mrb[0].mxu0
    %232 = vdwg.mxu0
    %v233 = vmax.f32 %v230, 0.0
    %v235 = vlaneseq
    %v236 = vshrl.u32 %v235, 7
    %v237 = vsub.s32 0, %v236
    %v238 = vrot.slane %v75, %v237
    %240 = vmatprep.subr.mxu0 0.0
    %241 = vmatpush1.msra.mxu0 %v55
    %242 = vmatprep.subr.mxu0 0.0
    %243 = vmatpush1.msra.mxu0 %v56
    %244 = vmatprep.subr.mxu0 0.0
    %245 = vmatpush1.msra.mxu0 %v57
    %246 = vmatprep.subr.mxu0 0.0
    %247 = vmatpush1.msra.mxu0 %v58
    %248 = vmatprep.subr.mxu0 0.0
    %249 = vmatpush1.msra.mxu0 %v59
    %250 = vmatprep.subr.mxu0 0.0
    %251 = vmatpush1.msra.mxu0 %v60
    %252 = vmatprep.subr.mxu0 0.0
    %253 = vmatpush1.msra.mxu0 %v61
    %254 = vmatprep.subr.mxu0 0.0
    %255 = vmatpush1.msra.mxu0 %v62
    %256 = vmatprep.subr.mxu0 0.0
    %257 = vmatpush1.msra.mxu0 %v63
    %258 = vmatprep.subr.mxu0 0.0
    %259 = vmatpush1.msra.mxu0 %v64
    %260 = vmatprep.subr.mxu0 0.0
    %261 = vmatpush1.msra.mxu0 %v65
    %262 = vmatprep.subr.mxu0 0.0
    %263 = vmatpush1.msra.mxu0 %v66
    %264 = vmatprep.subr.mxu0 0.0
    %265 = vmatpush1.msra.mxu0 %v67
    %266 = vmatprep.subr.mxu0 0.0
    %267 = vmatpush1.msra.mxu0 %v68
    %268 = vmatprep.subr.mxu0 0.0
    %269 = vmatpush1.msra.mxu0 %v69
    %270 = vmatprep.subr.mxu0 0.0
    %271 = vmatpush1.msra.mxu0 %v70
    %272 = vmatprep.subr.mxu0 0.0
    %273 = vmatpush1.msra.mxu0 0.0
    %274 = vmatprep.subr.mxu0 0.0
    %275 = vmatpush1.msra.mxu0 0.0
    %276 = vmatprep.subr.mxu0 0.0
    %277 = vmatpush1.msra.mxu0 0.0
    %278 = vmatprep.subr.mxu0 0.0
    %279 = vmatpush1.msra.mxu0 0.0
    %280 = vmatprep.subr.mxu0 0.0
    %281 = vmatpush1.msra.mxu0 0.0
    %282 = vmatprep.subr.mxu0 0.0
    %283 = vmatpush1.msra.mxu0 0.0
    %284 = vmatprep.subr.mxu0 0.0
    %285 = vmatpush1.msra.mxu0 0.0
    %286 = vmatprep.subr.mxu0 0.0
    %287 = vmatpush1.msra.mxu0 0.0
    %288 = vmatprep.subr.mxu0 0.0
    %289 = vmatpush1.msra.mxu0 0.0
    %290 = vmatprep.subr.mxu0 0.0
    %291 = vmatpush1.msra.mxu0 0.0
    %292 = vmatprep.subr.mxu0 0.0
    %293 = vmatpush1.msra.mxu0 0.0
    %294 = vmatprep.subr.mxu0 0.0
    %295 = vmatpush1.msra.mxu0 0.0
    %296 = vmatprep.subr.mxu0 0.0
    %297 = vmatpush1.msra.mxu0 0.0
    %298 = vmatprep.subr.mxu0 0.0
    %299 = vmatpush1.msra.mxu0 0.0
    %300 = vmatprep.subr.mxu0 0.0
    %301 = vmatpush1.msra.mxu0 0.0
    %302 = vmatprep.subr.mxu0 0.0
    %303 = vmatpush1.msra.mxu0 0.0
    %304 = vmatprep.mubr.f32.mxu0 0.0
    %305 = vmatmul.mubr.f32.gmra.mrb[0].mxu0 %v233
    %v306 = vpop.f32.mrb[0].mxu0
    %v307 = vadd.f32 %v238, %v306
    %v308 = vpop.f32.mrb[0].mxu0
    %309 = vdwg.mxu0
    %v310 = vtanh.pop %v307
    %v311 = vadd.f32 %v310, 1.0
    %v312 = vmul.f32 %v311, 6.0
    %v313 = vadd.f32 %v312, -10.0
    %v314 = vmul.f32 %v313, 1.442695
    %v315 = vpow.pop %v314
    %317 = vrot.lane.b32.xlu0 %v315, 124
    %v318 = vpop.permute.xlu0 %317
    %v320 = vmul.f32 %v32, %v318
    %v321 = vadd.f32 %v307, %v320
    %v322 = vmul.f32 %v32, -0.5
    %v323 = vmul.f32 %v322, %v32
    %325 = vrot.lane.b32.xlu0 %v313, 124
    %v326 = vpop.permute.xlu0 %325
    %v328 = vsub.f32 %v323, %v326
    %vm329 = vcmask 31744
    %v330 = vsel %vm329, %v328, 0.0
    %331 = vadd.xlane.f32.xlu0 %v330
    %v332 = vpop.xlane.xlu0 %331
    %v333 = vsub.f32 %v332, 3.675754
    %v334 = vtanh.pop %v321
    %v335 = vmul.f32 %v334, %v334
    %v336 = vsub.f32 1.0, %v335
    %v337 = vmax.f32 %v336, 0.0
    %v338 = vadd.f32 %v337, 1e-06
    %v339 = vlog2.pop %v338
    %v340 = vmul.f32 %v339, 0.6931472
    %v341 = vsel %vm329, %v340, 0.0
    %342 = vadd.xlane.f32.xlu0 %v341
    %v343 = vpop.xlane.xlu0 %342
    %v344 = vsub.f32 %v333, %v343
    %346 = vrot.lane.b32.xlu0 %v334, 4
    %v347 = vpop.permute.xlu0 %346
    %349 = vrot.lane.b32.xlu0 %v313, 4
    %v350 = vpop.permute.xlu0 %349
    %v352 = vsel %vm329, %v310, %v347
    %vm353 = vcmask 64512
    %v354 = vsel %vm353, %v352, %v350
    %vm355 = vcmask 97280
    %v356 = vsel %vm355, %v354, %v344
    %vm357 = vcmask 105472
    %v358 = vsel %vm357, %v356, 0.0
    %vm359 = vcmask 130048
    %360 = vst.msk [vmem:[%s4] sm:$0xff] %vm359, %v358
    // Predicated region
    $region22: #{actor_forward.1} parent=1 // pred_check
      _
    $region23: #{actor_forward.1} parent=1 // pred_check_branch
      %362 = sbr.rel (0) target = $region25
    $region24: #{actor_forward.1} parent=1 // pred_region
      _
    $region25: #{actor_forward.1} parent=1 // pred_fallthru
      _
    // Predicated region
    $region26: #{actor_forward.1} parent=1 // pred_check
      _
    $region27: #{actor_forward.1} parent=1 // pred_check_branch
      %364 = sbr.rel (0) target = $region29
    $region28: #{actor_forward.1} parent=1 // pred_region
      _
    $region29: #{actor_forward.1} parent=1 // pred_fallthru
      _
    %365 = vsyncpa [#allocation3], 1

</llo_original>
